<compile_context>
chip_gen: v7x
topology: tpu7x:2x2x1
jax: 0.10.0
libtpu: 0.0.40
codegen_flags: <defaults>
</compile_context>

<pallas_src>
import jax
import jax.numpy as jnp
from jax.experimental import pallas as pl
from jax.experimental.pallas import tpu as pltpu


_HAS_BUFFERED = hasattr(pl, "Buffered")


def _round_up(x, m):
    return (x + m - 1) // m * m


def _extract_kernel(w_ref, x_ref, wmu_ref, bmu_ref, sigma_ref, cbt_ref, c2_ref,
                    idx_ref, mu_ref, acc_ref):
    """grid = (token_tiles, L).  acc += w[l] * (x_l @ W_mu^T) every layer; on the last
    layer add bias, form z = mu + sigma in-register and emit the VQ argmin index."""
    l = pl.program_id(1)
    last_l = pl.num_programs(1) - 1

    # Per-layer MXU matmul (bf16 operands, f32 accumulation), weighted in f32.
    part = jnp.dot(x_ref[...].astype(jnp.bfloat16), wmu_ref[...],
                   preferred_element_type=jnp.float32)              # (TM, Dp)

    @pl.when(l == 0)
    def _():
        acc_ref[...] = w_ref[0, 0] * part

    @pl.when(l > 0)
    def _():
        acc_ref[...] += w_ref[0, l] * part

    # ---- finalize on the last layer ----
    @pl.when(l == last_l)
    def _():
        mu = acc_ref[...] + bmu_ref[...]                            # (TM, Dp)
        z = mu + sigma_ref[...]                                     # eval path: z = mu + sigma

        # VQ nearest neighbour: argmin_k ||z - c_k||^2.  ||z||^2 is a per-row constant,
        # so rank by ||c_k||^2 - 2 z.c_k (c2 precomputed; padded codes have c2 = 1e30).
        zc = jnp.dot(z.astype(jnp.bfloat16), cbt_ref[...],
                     preferred_element_type=jnp.float32)            # (TM, Kp)
        dist = c2_ref[...] - 2.0 * zc

        tm, kp = dist.shape
        iota = jax.lax.broadcasted_iota(jnp.int32, (tm, kp), 1)
        dmin = jnp.min(dist, axis=-1, keepdims=True)
        idx = jnp.min(jnp.where(dist == dmin, iota, kp),            # first index at the min
                      axis=-1, keepdims=True)                       # (TM, 1)

        idx_ref[...] = idx.astype(jnp.int32)
        mu_ref[...] = mu.astype(mu_ref.dtype)


def _build_call(L, M, H, Dp, Kp, TM, x_dtype, use_hints):
    n_tiles = pl.cdiv(M, TM)

    def x_spec():
        if use_hints and L >= 3:
            # Deepen the x pipeline so the heavy l==last step doesn't stall the stream.
            return pl.BlockSpec((None, TM, H), lambda i, l: (l, i, 0),
                                pipeline_mode=pl.Buffered(3))
        return pl.BlockSpec((None, TM, H), lambda i, l: (l, i, 0))

    def resident(shape):
        if use_hints:
            # Grid-invariant operand: single buffer (no wasted double-buffer VMEM).
            return pl.BlockSpec(shape, lambda i, l: (0, 0),
                                pipeline_mode=pl.Buffered(1))
        return pl.BlockSpec(shape, lambda i, l: (0, 0))

    # Explicit VMEM budget: x pipeline buffers + resident params + output buffers + scratch.
    itemsize = jnp.dtype(x_dtype).itemsize
    n_xbuf = 3 if (use_hints and L >= 3) else 2
    n_pbuf = 1 if use_hints else 2
    budget = (n_xbuf * TM * H * itemsize
              + n_pbuf * (H * Dp * 2 + Dp * Kp * 2 + 2 * Dp * 4 + Kp * 4)
              + 2 * (TM * Dp * 4 + TM * 128 * 4)      # mu + idx output buffers
              + TM * Dp * 4)                          # f32 accumulator scratch
    vmem_limit = int(min(max(budget + (8 << 20), 24 << 20), 96 << 20))

    return pl.pallas_call(
        _extract_kernel,
        grid=(n_tiles, L),
        in_specs=[
            pl.BlockSpec(memory_space=pltpu.MemorySpace.SMEM),   # softmax(w) (1, L)
            x_spec(),                                            # one layer-tile of hidden states
            resident((H, Dp)),                                   # fc_mu weight (transposed)
            resident((1, Dp)),                                   # fc_mu bias
            resident((1, Dp)),                                   # sigma = exp(0.5*logvar)
            resident((Dp, Kp)),                                  # codebook^T
            resident((1, Kp)),                                   # ||c_k||^2 (precomputed)
        ],
        out_specs=[
            pl.BlockSpec((TM, 1), lambda i, l: (i, 0)),          # argmin index
            pl.BlockSpec((TM, Dp), lambda i, l: (i, 0)),         # mu
        ],
        out_shape=[
            jax.ShapeDtypeStruct((M, 1), jnp.int32),
            jax.ShapeDtypeStruct((M, Dp), jnp.float32),
        ],
        scratch_shapes=[pltpu.VMEM((TM, Dp), jnp.float32)],      # weighted-matmul accumulator
        compiler_params=pltpu.CompilerParams(
            dimension_semantics=("parallel", "arbitrary"),
            vmem_limit_bytes=vmem_limit),
    )


def continue_latent_weighted_layer_extract(hidden_states, layer_weights,
                                           fc_mu_w, fc_mu_b, b_logvar, codebook,
                                           *, tm=512):
    """hidden_states: (L, B, T, H) stacked outputs.hidden_states (native dtype kept).
       fc_mu_w: (D, H) torch-Linear layout; fc_mu_b: (D,); b_logvar: (D,);
       codebook: (K, D) synthetic vq_module codebook.
       tm: token-tile size (512 default; HBM-bound kernel, VMEM budget is explicit)."""
    L, B, T, H = hidden_states.shape
    D = fc_mu_w.shape[0]
    K = codebook.shape[0]
    M = B * T

    LANE = 128
    Dp = _round_up(D, LANE)
    Kp = _round_up(K, LANE)

    tm = max(8, _round_up(tm, 8))
    TM = tm if M > tm else M                 # TM == M (full dim) is always a legal block
    if M == TM and M >= 1024:                # enough work: give megacore >= 2 token tiles
        TM = _round_up((M + 1) // 2, 8)

    # Tokens on sublanes, features on lanes.  Keep NATIVE dtype (bf16 halves the dominant
    # HBM read).  NO padding/copy of the token axis: the ragged last tile is handled by
    # Pallas (garbage rows only affect masked/unused output rows).
    x = hidden_states.reshape(L, M, H)

    # softmax over the tiny (L,) layer-weight vector (scalar work, lives in SMEM)
    w = jax.nn.softmax(layer_weights.astype(jnp.float32)).reshape(1, L)

    # Zero-pad D / K to 128 lanes (parameter tensors only -- tiny).  Zero-padded W_mu /
    # bias / sigma / codebook rows leave mu, z and the distances unchanged; padded codes
    # get ||c||^2 = 1e30 so they never win the argmin.
    wmu = jnp.zeros((H, Dp), jnp.bfloat16).at[:, :D].set(fc_mu_w.T.astype(jnp.bfloat16))
    bmu = jnp.zeros((1, Dp), jnp.float32).at[:, :D].set(fc_mu_b.astype(jnp.float32))
    sigma = jnp.exp(0.5 * b_logvar.astype(jnp.float32))                      # (D,)
    sigma_p = jnp.zeros((1, Dp), jnp.float32).at[:, :D].set(sigma)
    cbt = jnp.zeros((Dp, Kp), jnp.bfloat16).at[:D, :K].set(codebook.T.astype(jnp.bfloat16))
    c2 = jnp.full((1, Kp), 1e30, jnp.float32).at[:, :K].set(
        jnp.sum(codebook.astype(jnp.float32) ** 2, axis=-1))

    args = (w, x, wmu, bmu, sigma_p, cbt, c2)

    if _HAS_BUFFERED:
        try:
            idx, mu = _build_call(L, M, H, Dp, Kp, TM, x.dtype, True)(*args)
        except Exception:  # pipeline_mode hints unsupported by this Pallas build
            idx, mu = _build_call(L, M, H, Dp, Kp, TM, x.dtype, False)(*args)
    else:
        idx, mu = _build_call(L, M, H, Dp, Kp, TM, x.dtype, False)(*args)

    idx = idx[:, 0].reshape(B, T)
    mu = mu[:, :D].reshape(B, T, D)

    # z = mu + sigma rebuilt in XLA (tiny broadcast add) -> no (M, Dp) z write in the kernel.
    z = mu + sigma

    # one-hot * 1000 built in XLA (K x cheaper than writing the one-hot from the kernel)
    taste_logits = jax.nn.one_hot(idx, K, dtype=jnp.float32) * 1000.0
    training_info = {"z": z, "mu": mu, "logvar": b_logvar}
    return taste_logits, training_info


if __name__ == "__main__":
    # Small shapes consistent with the module: k=K codes, d=D latent,
    # llm_dim=H, llm_num_hidden_layers=4 -> L = 5 hidden states.
    B, T, H, D, K = 2, 8, 64, 32, 64
    L = 4 + 1

    key = jax.random.PRNGKey(0)
    k_hs, k_w, k_b, k_cb = jax.random.split(key, 4)

    hidden_states = jax.random.normal(k_hs, (L, B, T, H), dtype=jnp.float32)

    # Deterministic parameter init mirroring __init__:
    layer_weights = jnp.ones((L,), dtype=jnp.float32)               # nn.Parameter([1.0]*L)
    fc_mu_w = jax.random.normal(k_w, (D, H), dtype=jnp.float32) * (1.0 / jnp.sqrt(H))
    fc_mu_b = jax.random.normal(k_b, (D,), dtype=jnp.float32) * 0.01
    b_logvar = jnp.zeros((D,), dtype=jnp.float32)                   # nn.Parameter(zeros(d))
    codebook = jax.random.normal(k_cb, (K, D), dtype=jnp.float32)   # synthetic vq_module codebook
    # TODO(synk): real vq_module.get_indices_from_code is external; modeled here as an
    # L2 nearest-neighbour lookup over a synthetic (K, D) codebook.

    taste_logits, info = continue_latent_weighted_layer_extract(
        hidden_states, layer_weights, fc_mu_w, fc_mu_b, b_logvar, codebook)
    jax.block_until_ready(taste_logits)
    jax.block_until_ready(info["z"])

    # Precision-matched pure-JAX reference (per-layer bf16 MXU matmul, f32 accumulation,
    # same op order as the kernel).
    w = jax.nn.softmax(layer_weights.astype(jnp.float32))
    x_flat = hidden_states.reshape(L, B * T, H)
    wmu_bf16 = fc_mu_w.T.astype(jnp.bfloat16)
    acc = w[0] * jnp.dot(x_flat[0].astype(jnp.bfloat16), wmu_bf16,
                         preferred_element_type=jnp.float32)
    for l in range(1, L):
        acc = acc + w[l] * jnp.dot(x_flat[l].astype(jnp.bfloat16), wmu_bf16,
                                   preferred_element_type=jnp.float32)
    mu_ref = (acc + fc_mu_b).reshape(B, T, D)
    sigma_ref = jnp.exp(0.5 * b_logvar)
    z_ref = mu_ref + sigma_ref
    zc_ref = jnp.dot(z_ref.reshape(B * T, D).astype(jnp.bfloat16),
                     codebook.T.astype(jnp.bfloat16),
                     preferred_element_type=jnp.float32).reshape(B, T, K)
    dist_ref = jnp.sum(codebook ** 2, -1)[None, None, :] - 2.0 * zc_ref
    idx_ref = jnp.argmin(dist_ref, axis=-1)
    logits_ref = jax.nn.one_hot(idx_ref, K, dtype=jnp.float32) * 1000.0

    # Full-f32 formulation of the module (weighted sum before the matmul) -- loose check
    # that commuting the layer weighting through fc_mu preserved the semantics.
    hidden_f32 = jnp.sum(w.reshape(L, 1, 1, 1) * hidden_states, axis=0)
    mu_f32 = hidden_f32 @ fc_mu_w.T + fc_mu_b

    assert taste_logits.shape == (B, T, K)
    assert info["z"].shape == (B, T, D) and info["mu"].shape == (B, T, D)
    assert jnp.allclose(info["mu"], mu_ref, atol=5e-3, rtol=5e-3)
    assert jnp.allclose(info["z"], z_ref, atol=5e-3, rtol=5e-3)
    assert jnp.allclose(info["mu"], mu_f32, atol=1e-1, rtol=1e-1)
    assert jnp.allclose(taste_logits, logits_ref)
    print("KERNEL_OK")
</pallas_src>

<mosaic_0001>
module attributes {stable_mosaic.version = 11 : i64} {
  func.func @_extract_kernel(%arg0: i32, %arg1: i32, %arg2: memref<1x5xf32, #tpu.memory_space<smem>>, %arg3: memref<1x16x64xf32, #tpu.memory_space<vmem>>, %arg4: memref<64x128xbf16, #tpu.memory_space<vmem>>, %arg5: memref<1x128xf32, #tpu.memory_space<vmem>>, %arg6: memref<1x128xf32, #tpu.memory_space<vmem>>, %arg7: memref<128x128xbf16, #tpu.memory_space<vmem>>, %arg8: memref<1x128xf32, #tpu.memory_space<vmem>>, %arg9: memref<16x1xi32, #tpu.memory_space<vmem>>, %arg10: memref<16x128xf32, #tpu.memory_space<vmem>>, %arg11: memref<16x128xf32, #tpu.memory_space<vmem>>) attributes {dimension_semantics = [#tpu.dimension_semantics<parallel>, #tpu.dimension_semantics<arbitrary>], iteration_bounds = array<i64: 1, 5>, scalar_prefetch = 0 : i64, scratch_operands = 1 : i64, tpu.core_type = #tpu.core_type<tc>, window_params = [{transform_indices = @transform_0, window_bounds = array<i64: 1, 5>}, {transform_indices = @transform_1, window_bounds = array<i64: 1, 16, 64>}, {pipeline_mode = #tpu.pipeline_mode<synchronous>, transform_indices = @transform_2, window_bounds = array<i64: 64, 128>}, {pipeline_mode = #tpu.pipeline_mode<synchronous>, transform_indices = @transform_3, window_bounds = array<i64: 1, 128>}, {pipeline_mode = #tpu.pipeline_mode<synchronous>, transform_indices = @transform_4, window_bounds = array<i64: 1, 128>}, {pipeline_mode = #tpu.pipeline_mode<synchronous>, transform_indices = @transform_5, window_bounds = array<i64: 128, 128>}, {pipeline_mode = #tpu.pipeline_mode<synchronous>, transform_indices = @transform_6, window_bounds = array<i64: 1, 128>}, {transform_indices = @transform_7, window_bounds = array<i64: 16, 1>}, {transform_indices = @transform_8, window_bounds = array<i64: 16, 128>}]} {
    %c0 = arith.constant 0 : index
    %c0_0 = arith.constant 0 : index
    %c0_1 = arith.constant 0 : index
    %0 = vector.load %arg3[%c0, %c0_0, %c0_1] : memref<1x16x64xf32, #tpu.memory_space<vmem>>, vector<1x16x64xf32>
    %1 = vector.shape_cast %0 : vector<1x16x64xf32> to vector<16x64xf32>
    %2 = arith.truncf %1 : vector<16x64xf32> to vector<16x64xbf16>
    %c0_2 = arith.constant 0 : index
    %c0_3 = arith.constant 0 : index
    %3 = vector.load %arg4[%c0_2, %c0_3] : memref<64x128xbf16, #tpu.memory_space<vmem>>, vector<64x128xbf16>
    %cst = arith.constant dense<0.000000e+00> : vector<16x128xf32>
    %4 = tpu.matmul %2, %3, %cst {dimension_numbers = #tpu.dot_dimension_numbers<[1], [0], [0], [1], [0, 0, 1, 1], [], []>} : vector<16x64xbf16>, vector<64x128xbf16>, vector<16x128xf32> -> vector<16x128xf32>
    %c0_i32 = arith.constant 0 : i32
    %5 = arith.cmpi eq, %arg1, %c0_i32 : i32
    %6 = arith.extui %5 : i1 to i32
    %c0_i32_4 = arith.constant 0 : i32
    %7 = arith.cmpi ne, %6, %c0_i32_4 : i32
    scf.if %7 {
      %c0_8 = arith.constant 0 : index
      %c0_9 = arith.constant 0 : index
      %14 = memref.load %arg2[%c0_8, %c0_9] : memref<1x5xf32, #tpu.memory_space<smem>>
      %15 = vector.broadcast %14 : f32 to vector<16x128xf32>
      %16 = arith.mulf %15, %4 : vector<16x128xf32>
      %c0_10 = arith.constant 0 : index
      %c0_11 = arith.constant 0 : index
      %17 = vector.load %arg11[%c0_10, %c0_11] : memref<16x128xf32, #tpu.memory_space<vmem>>, vector<16x128xf32>
      tpu.vector_store %arg11[%c0_10, %c0_11], %16 {strides = array<i32>} : memref<16x128xf32, #tpu.memory_space<vmem>>, vector<16x128xf32>,
    } else {
    }
    %c0_i32_5 = arith.constant 0 : i32
    %8 = arith.cmpi sgt, %arg1, %c0_i32_5 : i32
    %9 = arith.extui %8 : i1 to i32
    %c0_i32_6 = arith.constant 0 : i32
    %10 = arith.cmpi ne, %9, %c0_i32_6 : i32
    scf.if %10 {
      %c0_8 = arith.constant 0 : index
      %c0_9 = arith.constant 0 : index
      %14 = vector.load %arg11[%c0_8, %c0_9] : memref<16x128xf32, #tpu.memory_space<vmem>>, vector<16x128xf32>
      %c0_10 = arith.constant 0 : index
      %15 = arith.index_cast %arg1 : i32 to index
      %16 = memref.load %arg2[%c0_10, %15] : memref<1x5xf32, #tpu.memory_space<smem>>
      %17 = vector.broadcast %16 : f32 to vector<16x128xf32>
      %18 = arith.mulf %17, %4 : vector<16x128xf32>
      %19 = arith.addf %14, %18 : vector<16x128xf32>
      %c0_11 = arith.constant 0 : index
      %c0_12 = arith.constant 0 : index
      %20 = vector.load %arg11[%c0_11, %c0_12] : memref<16x128xf32, #tpu.memory_space<vmem>>, vector<16x128xf32>
      tpu.vector_store %arg11[%c0_11, %c0_12], %19 {strides = array<i32>} : memref<16x128xf32, #tpu.memory_space<vmem>>, vector<16x128xf32>,
    } else {
    }
    %c4_i32 = arith.constant 4 : i32
    %11 = arith.cmpi eq, %arg1, %c4_i32 : i32
    %12 = arith.extui %11 : i1 to i32
    %c0_i32_7 = arith.constant 0 : i32
    %13 = arith.cmpi ne, %12, %c0_i32_7 : i32
    scf.if %13 {
      %c0_8 = arith.constant 0 : index
      %c0_9 = arith.constant 0 : index
      %14 = vector.load %arg11[%c0_8, %c0_9] : memref<16x128xf32, #tpu.memory_space<vmem>>, vector<16x128xf32>
      %c0_10 = arith.constant 0 : index
      %c0_11 = arith.constant 0 : index
      %15 = vector.load %arg5[%c0_10, %c0_11] : memref<1x128xf32, #tpu.memory_space<vmem>>, vector<1x128xf32>
      %16 = vector.broadcast %15 : vector<1x128xf32> to vector<16x128xf32>
      %17 = arith.addf %14, %16 : vector<16x128xf32>
      %c0_12 = arith.constant 0 : index
      %c0_13 = arith.constant 0 : index
      %18 = vector.load %arg6[%c0_12, %c0_13] : memref<1x128xf32, #tpu.memory_space<vmem>>, vector<1x128xf32>
      %19 = vector.broadcast %18 : vector<1x128xf32> to vector<16x128xf32>
      %20 = arith.addf %17, %19 : vector<16x128xf32>
      %21 = arith.truncf %20 : vector<16x128xf32> to vector<16x128xbf16>
      %c0_14 = arith.constant 0 : index
      %c0_15 = arith.constant 0 : index
      %22 = vector.load %arg7[%c0_14, %c0_15] : memref<128x128xbf16, #tpu.memory_space<vmem>>, vector<128x128xbf16>
      %cst_16 = arith.constant dense<0.000000e+00> : vector<16x128xf32>
      %23 = tpu.matmul %21, %22, %cst_16 {dimension_numbers = #tpu.dot_dimension_numbers<[1], [0], [0], [1], [0, 0, 1, 1], [], []>} : vector<16x128xbf16>, vector<128x128xbf16>, vector<16x128xf32> -> vector<16x128xf32>
      %c0_17 = arith.constant 0 : index
      %c0_18 = arith.constant 0 : index
      %24 = vector.load %arg8[%c0_17, %c0_18] : memref<1x128xf32, #tpu.memory_space<vmem>>, vector<1x128xf32>
      %cst_19 = arith.constant 2.000000e+00 : f32
      %25 = vector.broadcast %cst_19 : f32 to vector<16x128xf32>
      %26 = arith.mulf %25, %23 : vector<16x128xf32>
      %27 = vector.broadcast %24 : vector<1x128xf32> to vector<16x128xf32>
      %28 = arith.subf %27, %26 : vector<16x128xf32>
      %29 = tpu.iota {dimensions = array<i32: 1>} : vector<16x128xi32>
      %cst_20 = arith.constant dense<0x7F800000> : vector<16xf32>
      %30 = vector.multi_reduction <minimumf>, %28, %cst_20 [1] : vector<16x128xf32> to vector<16xf32>
      %31 = vector.shape_cast %30 : vector<16xf32> to vector<16x1xf32>
      %32 = vector.broadcast %31 : vector<16x1xf32> to vector<16x128xf32>
      %33 = arith.cmpf oeq, %28, %32 : vector<16x128xf32>
      %c128_i32 = arith.constant 128 : i32
      %34 = vector.broadcast %c128_i32 : i32 to vector<16x128xi32>
      %35 = arith.select %33, %29, %34 : vector<16x128xi1>, vector<16x128xi32>
      %cst_21 = arith.constant dense<2147483647> : vector<16xi32>
      %36 = vector.multi_reduction <minsi>, %35, %cst_21 [1] : vector<16x128xi32> to vector<16xi32>
      %37 = vector.shape_cast %36 : vector<16xi32> to vector<16x1xi32>
      %c0_22 = arith.constant 0 : index
      %c0_23 = arith.constant 0 : index
      %38 = vector.load %arg9[%c0_22, %c0_23] : memref<16x1xi32, #tpu.memory_space<vmem>>, vector<16x1xi32>
      tpu.vector_store %arg9[%c0_22, %c0_23], %37 {strides = array<i32>} : memref<16x1xi32, #tpu.memory_space<vmem>>, vector<16x1xi32>,
      %c0_24 = arith.constant 0 : index
      %c0_25 = arith.constant 0 : index
      %39 = vector.load %arg10[%c0_24, %c0_25] : memref<16x128xf32, #tpu.memory_space<vmem>>, vector<16x128xf32>
      tpu.vector_store %arg10[%c0_24, %c0_25], %17 {strides = array<i32>} : memref<16x128xf32, #tpu.memory_space<vmem>>, vector<16x128xf32>,
    } else {
    }
    return
  }
  func.func @transform_0(%arg0: i32, %arg1: i32) -> (i32, i32) {
    %c0_i32 = arith.constant 0 : i32
    %c0_i32_0 = arith.constant 0 : i32
    %c0_i32_1 = arith.constant 0 : i32
    return %c0_i32, %c0_i32_0 : i32, i32
  }
  func.func @transform_1(%arg0: i32, %arg1: i32) -> (i32, i32, i32) {
    %c0_i32 = arith.constant 0 : i32
    %c0_i32_0 = arith.constant 0 : i32
    return %arg1, %arg0, %c0_i32 : i32, i32, i32
  }
  func.func @transform_2(%arg0: i32, %arg1: i32) -> (i32, i32) {
    %c0_i32 = arith.constant 0 : i32
    %c0_i32_0 = arith.constant 0 : i32
    %c0_i32_1 = arith.constant 0 : i32
    return %c0_i32, %c0_i32_0 : i32, i32
  }
  func.func @transform_3(%arg0: i32, %arg1: i32) -> (i32, i32) {
    %c0_i32 = arith.constant 0 : i32
    %c0_i32_0 = arith.constant 0 : i32
    %c0_i32_1 = arith.constant 0 : i32
    return %c0_i32, %c0_i32_0 : i32, i32
  }
  func.func @transform_4(%arg0: i32, %arg1: i32) -> (i32, i32) {
    %c0_i32 = arith.constant 0 : i32
    %c0_i32_0 = arith.constant 0 : i32
    %c0_i32_1 = arith.constant 0 : i32
    return %c0_i32, %c0_i32_0 : i32, i32
  }
  func.func @transform_5(%arg0: i32, %arg1: i32) -> (i32, i32) {
    %c0_i32 = arith.constant 0 : i32
    %c0_i32_0 = arith.constant 0 : i32
    %c0_i32_1 = arith.constant 0 : i32
    return %c0_i32, %c0_i32_0 : i32, i32
  }
  func.func @transform_6(%arg0: i32, %arg1: i32) -> (i32, i32) {
    %c0_i32 = arith.constant 0 : i32
    %c0_i32_0 = arith.constant 0 : i32
    %c0_i32_1 = arith.constant 0 : i32
    return %c0_i32, %c0_i32_0 : i32, i32
  }
  func.func @transform_7(%arg0: i32, %arg1: i32) -> (i32, i32) {
    %c0_i32 = arith.constant 0 : i32
    %c0_i32_0 = arith.constant 0 : i32
    return %arg0, %c0_i32 : i32, i32
  }
  func.func @transform_8(%arg0: i32, %arg1: i32) -> (i32, i32) {
    %c0_i32 = arith.constant 0 : i32
    %c0_i32_0 = arith.constant 0 : i32
    return %arg0, %c0_i32 : i32, i32
  }
}

</mosaic_0001>

<llo_original>
// kernel: tpu_custom_call.1
$region0: #{tpu_custom_call.1}
  #allocation0 [shape = 'u32[]', space=smem, size = 0x4, offset = 0x4, fixed_abs, tag = 'smem constant byte address 0x4 - core index']
  #allocation1 [shape = 'u32[144,128]{1,0:T(1,128)}', space=vmem, size = 0x12000, scoped, tag = 'internal scratch']
  #allocation2 [shape = 'f32[16,128]{1,0:T(8,128)}', space=vmem, size = 0x2000, scoped, tag = 'scratch operand']
  %s0 = inlined_call_operand.hbm [shape: f32[1,5], index: 0, kind: input, shape index: {}]
  %s1 = inlined_call_operand.hbm [shape: f32[5,16,64], index: 1, kind: input, shape index: {}]
  %s2 = inlined_call_operand.hbm [shape: bf16[64,128], index: 2, kind: input, shape index: {}]
  %s3 = inlined_call_operand.vmem [shape: f32[1,128], index: 3, kind: input, shape index: {}]
  %s4 = inlined_call_operand.vmem [shape: f32[1,128], index: 4, kind: input, shape index: {}]
  %s5 = inlined_call_operand.hbm [shape: bf16[128,128], index: 5, kind: input, shape index: {}]
  %s6 = inlined_call_operand.vmem [shape: f32[1,128], index: 6, kind: input, shape index: {}]
  %s7 = inlined_call_operand.vmem [shape: s32[16,1], index: 7, kind: output, shape index: {0}]
  %s8 = inlined_call_operand.hbm [shape: f32[16,128], index: 8, kind: output, shape index: {1}]
  %9 = xla_tuple %s7, %s8
  %s10 = sld [smem:[#allocation0]]
  $region97: #{tpu_custom_call.1} parent=0
    _
  %s12 = ssub.s32 1, %s10
  %s13 = scalar_select 0, %s12, %s10
  $region1: #{tpu_custom_call.1} parent=0
    #allocation3 [shape = 'u8[512]{0}', space=smem, size = 0x200, scoped, tag = 'input window, operand 0, single buffered']
    #allocation4 [shape = 's32[2]{0}', space=sflag, size = 0x8, scoped, tag = 'scoped memory for tpu_custom_call.1']
    #allocation5 [shape = 's32[2]{0}', space=sflag, size = 0x8, scoped, tag = 'scoped memory for tpu_custom_call.1']
    #allocation6 [shape = 's32[2]{0}', space=sflag, size = 0x8, scoped, tag = 'scoped memory for tpu_custom_call.1']
    #allocation7 [shape = 'u8[16384]{0}', space=vmem, size = 0x4000, scoped, tag = 'input window, operand 1']
    #allocation8 [shape = 'u8[16384]{0}', space=vmem, size = 0x4000, scoped, tag = 'input window, operand 2, single buffered']
    #allocation9 [shape = 's32[1]{0}', space=sflag, size = 0x4, scoped, tag = 'scoped memory for tpu_custom_call.1']
    #allocation10 [shape = 'u8[32768]{0}', space=vmem, size = 0x8000, scoped, tag = 'input window, operand 5, single buffered']
    #allocation11 [shape = 'u8[8192]{0}', space=vmem, size = 0x2000, scoped, tag = 'output window, operand 1, single buffered']
    %14 = vsyncpa [#allocation6], 0
    %15 = vsyncpa [#allocation4], 0
    %s16 = scalar_lea.sflag [#allocation4], 1
    %17 = vsyncpa %s16, 0
    %18 = vsyncpa [#allocation9], 0
    %19 = vsyncpa [#allocation5], 0
    loop: start=0, step=1, limit=7
    $region2: #{tpu_custom_call.1} parent=1 // loop_pre_header
      _
    $region3: #{tpu_custom_call.1} parent=1 // loop_header
      %s21 = sphi 0, %s25
      %p22 = scmp.ge.s32.totalorder %s21, 7
      %s28 = sphi 0, %s40
      %s29 = sphi 0, %s36
      %s30 = sphi 0, %s28
      %s31 = sphi 0, %s29
      %s32 = sphi 0, %s30
      %s33 = sphi 0, %s31
      %s41 = sphi 0, %s41
      %s43 = sphi 0, %s41
      %s44 = sphi 0, %s43
      %s58 = sphi 0, %s44
      %s66 = sphi 0, %s68
      %s69 = sphi 0, %s66
      %s70 = sphi 0, %s69
      %s86 = sphi 0, %s70
      %s90 = sphi 0, %s90
      %s92 = sphi 0, %s90
      %s93 = sphi 0, %s92
      %s107 = sphi 0, %s93
      %s111 = sphi 0, %s111
      %s113 = sphi 0, %s111
      %s114 = sphi 0, %s113
      %s128 = sphi 0, %s114
      %s132 = sphi 0, %s132
      %s134 = sphi 0, %s132
      %s135 = sphi 0, %s134
      %s149 = sphi 0, %s135
      %s153 = sphi 0, %s153
      %s155 = sphi 0, %s153
      %s156 = sphi 0, %s155
      %s170 = sphi 0, %s156
      %s174 = sphi 0, %s174
      %s176 = sphi 0, %s174
      %s177 = sphi 0, %s176
      %s191 = sphi 0, %s177
      %s197 = sphi 0, %s199
      %s200 = sphi 0, %s197
      %s201 = sphi 0, %s200
      %s217 = sphi 0, %s201
      %s223 = sphi 0, %s225
      %s226 = sphi 0, %s223
      %s227 = sphi 0, %s226
      %s243 = sphi 0, %s227
    $region4: #{tpu_custom_call.1} parent=1 // loop_header_branch
      %24 = sbr.rel (%p22) target = $region8
    $region5: #{tpu_custom_call.1} parent=1 // loop_body
      %s26 = ssub.s32 %s21, 1
      %s27 = ssub.s32 %s21, 2
      %s34 = sadd.s32 1, %s29
      %p35 = scmp.ge.s32.totalorder %s34, 5
      %s36 = scalar_select %p35, 0, %s34
      %s37 = sadd.s32 1, %s28
      %s38 = scalar_select %p35, %s37, %s28
      %p39 = scmp.ge.s32.totalorder %s38, 1
      %s40 = scalar_select %p39, 0, %s38
      %s42 = sadd.s32 %s41, 1
      %p45 = scmp.eq.s32.totalorder %s21, 4
      %p46 = scmp.ne.s32.totalorder %s41, %s43
      %p47 = scmp.eq.s32.totalorder %s21, 0
      %p48 = por %p46, %p47
      %p49 = scmp.ne.s32.totalorder %s41, %s43
      %p50 = scmp.eq.s32.totalorder %s26, 4
      %p51 = por %p49, %p50
      %p52 = scmp.ne.s32.totalorder %s43, %s44
      %p53 = scmp.eq.s32.totalorder %s26, 0
      %p54 = por %p52, %p53
      %p55 = scmp.ne.s32.totalorder %s43, %s44
      %p56 = scmp.eq.s32.totalorder %s27, 4
      %p57 = por %p55, %p56
      %p59 = scmp.ne.s32.totalorder %s44, %s58
      %p60 = scmp.eq.s32.totalorder %s27, 0
      %p61 = por %p59, %p60
      %s62 = ssub.s32 %s29, %s36
      %s63 = ssub.s32 %s28, %s40
      %s64 = sor.u32 %s62, %s63
      %p65 = scmp.eq.s32.totalorder %s64, 0
      %s67 = sadd.s32 %s66, 1
      %s68 = scalar_select %p65, %s66, %s67
      %p71 = pneg %p65
      %p72 = scmp.eq.s32.totalorder %s21, 4
      %p73 = por %p71, %p72
      %p74 = scmp.ne.s32.totalorder %s66, %s69
      %p75 = scmp.eq.s32.totalorder %s21, 0
      %p76 = por %p74, %p75
      %p77 = scmp.ne.s32.totalorder %s66, %s69
      %p78 = scmp.eq.s32.totalorder %s26, 4
      %p79 = por %p77, %p78
      %p80 = scmp.ne.s32.totalorder %s69, %s70
      %p81 = scmp.eq.s32.totalorder %s26, 0
      %p82 = por %p80, %p81
      %p83 = scmp.ne.s32.totalorder %s69, %s70
      %p84 = scmp.eq.s32.totalorder %s27, 4
      %p85 = por %p83, %p84
      %p87 = scmp.ne.s32.totalorder %s70, %s86
      %p88 = scmp.eq.s32.totalorder %s27, 0
      %p89 = por %p87, %p88
      %s91 = sadd.s32 %s90, 1
      %p94 = scmp.eq.s32.totalorder %s21, 4
      %p95 = scmp.ne.s32.totalorder %s90, %s92
      %p96 = scmp.eq.s32.totalorder %s21, 0
      %p97 = por %p95, %p96
      %p98 = scmp.ne.s32.totalorder %s90, %s92
      %p99 = scmp.eq.s32.totalorder %s26, 4
      %p100 = por %p98, %p99
      %p101 = scmp.ne.s32.totalorder %s92, %s93
      %p102 = scmp.eq.s32.totalorder %s26, 0
      %p103 = por %p101, %p102
      %p104 = scmp.ne.s32.totalorder %s92, %s93
      %p105 = scmp.eq.s32.totalorder %s27, 4
      %p106 = por %p104, %p105
      %p108 = scmp.ne.s32.totalorder %s93, %s107
      %p109 = scmp.eq.s32.totalorder %s27, 0
      %p110 = por %p108, %p109
      %s112 = sadd.s32 %s111, 1
      %p115 = scmp.eq.s32.totalorder %s21, 4
      %p116 = scmp.ne.s32.totalorder %s111, %s113
      %p117 = scmp.eq.s32.totalorder %s21, 0
      %p118 = por %p116, %p117
      %p119 = scmp.ne.s32.totalorder %s111, %s113
      %p120 = scmp.eq.s32.totalorder %s26, 4
      %p121 = por %p119, %p120
      %p122 = scmp.ne.s32.totalorder %s113, %s114
      %p123 = scmp.eq.s32.totalorder %s26, 0
      %p124 = por %p122, %p123
      %p125 = scmp.ne.s32.totalorder %s113, %s114
      %p126 = scmp.eq.s32.totalorder %s27, 4
      %p127 = por %p125, %p126
      %p129 = scmp.ne.s32.totalorder %s114, %s128
      %p130 = scmp.eq.s32.totalorder %s27, 0
      %p131 = por %p129, %p130
      %s133 = sadd.s32 %s132, 1
      %p136 = scmp.eq.s32.totalorder %s21, 4
      %p137 = scmp.ne.s32.totalorder %s132, %s134
      %p138 = scmp.eq.s32.totalorder %s21, 0
      %p139 = por %p137, %p138
      %p140 = scmp.ne.s32.totalorder %s132, %s134
      %p141 = scmp.eq.s32.totalorder %s26, 4
      %p142 = por %p140, %p141
      %p143 = scmp.ne.s32.totalorder %s134, %s135
      %p144 = scmp.eq.s32.totalorder %s26, 0
      %p145 = por %p143, %p144
      %p146 = scmp.ne.s32.totalorder %s134, %s135
      %p147 = scmp.eq.s32.totalorder %s27, 4
      %p148 = por %p146, %p147
      %p150 = scmp.ne.s32.totalorder %s135, %s149
      %p151 = scmp.eq.s32.totalorder %s27, 0
      %p152 = por %p150, %p151
      %s154 = sadd.s32 %s153, 1
      %p157 = scmp.eq.s32.totalorder %s21, 4
      %p158 = scmp.ne.s32.totalorder %s153, %s155
      %p159 = scmp.eq.s32.totalorder %s21, 0
      %p160 = por %p158, %p159
      %p161 = scmp.ne.s32.totalorder %s153, %s155
      %p162 = scmp.eq.s32.totalorder %s26, 4
      %p163 = por %p161, %p162
      %p164 = scmp.ne.s32.totalorder %s155, %s156
      %p165 = scmp.eq.s32.totalorder %s26, 0
      %p166 = por %p164, %p165
      %p167 = scmp.ne.s32.totalorder %s155, %s156
      %p168 = scmp.eq.s32.totalorder %s27, 4
      %p169 = por %p167, %p168
      %p171 = scmp.ne.s32.totalorder %s156, %s170
      %p172 = scmp.eq.s32.totalorder %s27, 0
      %p173 = por %p171, %p172
      %s175 = sadd.s32 %s174, 1
      %p178 = scmp.eq.s32.totalorder %s21, 4
      %p179 = scmp.ne.s32.totalorder %s174, %s176
      %p180 = scmp.eq.s32.totalorder %s21, 0
      %p181 = por %p179, %p180
      %p182 = scmp.ne.s32.totalorder %s174, %s176
      %p183 = scmp.eq.s32.totalorder %s26, 4
      %p184 = por %p182, %p183
      %p185 = scmp.ne.s32.totalorder %s176, %s177
      %p186 = scmp.eq.s32.totalorder %s26, 0
      %p187 = por %p185, %p186
      %p188 = scmp.ne.s32.totalorder %s176, %s177
      %p189 = scmp.eq.s32.totalorder %s27, 4
      %p190 = por %p188, %p189
      %p192 = scmp.ne.s32.totalorder %s177, %s191
      %p193 = scmp.eq.s32.totalorder %s27, 0
      %p194 = por %p192, %p193
      %s195 = ssub.s32 %s28, %s40
      %p196 = scmp.eq.s32.totalorder %s195, 0
      %s198 = sadd.s32 %s197, 1
      %s199 = scalar_select %p196, %s197, %s198
      %p202 = pneg %p196
      %p203 = scmp.eq.s32.totalorder %s21, 4
      %p204 = por %p202, %p203
      %p205 = scmp.ne.s32.totalorder %s197, %s200
      %p206 = scmp.eq.s32.totalorder %s21, 0
      %p207 = por %p205, %p206
      %p208 = scmp.ne.s32.totalorder %s197, %s200
      %p209 = scmp.eq.s32.totalorder %s26, 4
      %p210 = por %p208, %p209
      %p211 = scmp.ne.s32.totalorder %s200, %s201
      %p212 = scmp.eq.s32.totalorder %s26, 0
      %p213 = por %p211, %p212
      %p214 = scmp.ne.s32.totalorder %s200, %s201
      %p215 = scmp.eq.s32.totalorder %s27, 4
      %p216 = por %p214, %p215
      %p218 = scmp.ne.s32.totalorder %s201, %s217
      %p219 = scmp.eq.s32.totalorder %s27, 0
      %p220 = por %p218, %p219
      %s221 = ssub.s32 %s28, %s40
      %p222 = scmp.eq.s32.totalorder %s221, 0
      %s224 = sadd.s32 %s223, 1
      %s225 = scalar_select %p222, %s223, %s224
      %p228 = pneg %p222
      %p229 = scmp.eq.s32.totalorder %s21, 4
      %p230 = por %p228, %p229
      %p231 = scmp.ne.s32.totalorder %s223, %s226
      %p232 = scmp.eq.s32.totalorder %s21, 0
      %p233 = por %p231, %p232
      %p234 = scmp.ne.s32.totalorder %s223, %s226
      %p235 = scmp.eq.s32.totalorder %s26, 4
      %p236 = por %p234, %p235
      %p237 = scmp.ne.s32.totalorder %s226, %s227
      %p238 = scmp.eq.s32.totalorder %s26, 0
      %p239 = por %p237, %p238
      %p240 = scmp.ne.s32.totalorder %s226, %s227
      %p241 = scmp.eq.s32.totalorder %s27, 4
      %p242 = por %p240, %p241
      %p244 = scmp.ne.s32.totalorder %s227, %s243
      %p245 = scmp.eq.s32.totalorder %s27, 0
      %p246 = por %p244, %p245
      %p247 = scmp.le.s32.totalorder 1, %s21
      %p248 = scmp.lt.s32.totalorder %s21, 6
      %p249 = pnand %p247, %p248
      %p250 = pneg %p249
      // Predicated region
      $region9: #{tpu_custom_call.1} parent=5 // pred_check
        _
      $region10: #{tpu_custom_call.1} parent=5 // pred_check_branch
        %252 = sbr.rel (%p249) target = $region12
      $region11: #{tpu_custom_call.1} parent=5 // pred_region
        %s253 = ssub.s32 %s21, 1
        // Predicated region
        $region13: #{tpu_custom_call.1} parent=11 // pred_check
          %p254 = pneg %p54
        $region14: #{tpu_custom_call.1} parent=11 // pred_check_branch
          %256 = sbr.rel (%p254) target = $region16
        $region15: #{tpu_custom_call.1} parent=11 // pred_region
          %s258 = ssub.s32 16, 16
          %259 = vsyncadd [#allocation6], %s258
          %262 = dma.hbm_to_smem %s0, 16, [#allocation3], [#allocation6]
        $region16: #{tpu_custom_call.1} parent=11 // pred_fallthru
          _
        // Predicated region
        $region17: #{tpu_custom_call.1} parent=11 // pred_check
          %p263 = pneg %p103
        $region18: #{tpu_custom_call.1} parent=11 // pred_check_branch
          %265 = sbr.rel (%p263) target = $region20
        $region19: #{tpu_custom_call.1} parent=11 // pred_region
          %s267 = ssub.s32 512, 512
          %268 = vsyncadd [#allocation9], %s267
          %s269 = sshll.u32 [#allocation8], 4
          %s270 = int_to_ptr.vmem [resolvable:$true] %s269
          %275 = dma.hbm_to_vmem [thread:$0]  %s2, 512, %s270, [#allocation9], 64, 64, 4
        $region20: #{tpu_custom_call.1} parent=11 // pred_fallthru
          _
        // Predicated region
        $region21: #{tpu_custom_call.1} parent=11 // pred_check
          %p276 = pneg %p124
        $region22: #{tpu_custom_call.1} parent=11 // pred_check_branch
          %278 = sbr.rel (%p276) target = $region24
        $region23: #{tpu_custom_call.1} parent=11 // pred_region
          _
        $region24: #{tpu_custom_call.1} parent=11 // pred_fallthru
          _
        // Predicated region
        $region25: #{tpu_custom_call.1} parent=11 // pred_check
          %p279 = pneg %p145
        $region26: #{tpu_custom_call.1} parent=11 // pred_check_branch
          %281 = sbr.rel (%p279) target = $region28
        $region27: #{tpu_custom_call.1} parent=11 // pred_region
          _
        $region28: #{tpu_custom_call.1} parent=11 // pred_fallthru
          _
        // Predicated region
        $region29: #{tpu_custom_call.1} parent=11 // pred_check
          %p282 = pneg %p166
        $region30: #{tpu_custom_call.1} parent=11 // pred_check_branch
          %284 = sbr.rel (%p282) target = $region32
        $region31: #{tpu_custom_call.1} parent=11 // pred_region
          %s286 = ssub.s32 1024, 1024
          %287 = vsyncadd [#allocation9], %s286
          %s288 = sshll.u32 [#allocation10], 4
          %s289 = int_to_ptr.vmem [resolvable:$true] %s288
          %294 = dma.hbm_to_vmem [thread:$0]  %s5, 1024, %s289, [#allocation9], 64, 64, 4
        $region32: #{tpu_custom_call.1} parent=11 // pred_fallthru
          _
        // Predicated region
        $region33: #{tpu_custom_call.1} parent=11 // pred_check
          %p295 = pneg %p187
        $region34: #{tpu_custom_call.1} parent=11 // pred_check_branch
          %297 = sbr.rel (%p295) target = $region36
        $region35: #{tpu_custom_call.1} parent=11 // pred_region
          _
        $region36: #{tpu_custom_call.1} parent=11 // pred_fallthru
          _
      $region12: #{tpu_custom_call.1} parent=5 // pred_fallthru
        _
      %p298 = scmp.lt.s32.totalorder %s21, 5
      // Predicated region
      $region37: #{tpu_custom_call.1} parent=5 // pred_check
        %p299 = pneg %p298
      $region38: #{tpu_custom_call.1} parent=5 // pred_check_branch
        %301 = sbr.rel (%p299) target = $region40
      $region39: #{tpu_custom_call.1} parent=5 // pred_region
        // Predicated region
        $region41: #{tpu_custom_call.1} parent=39 // pred_check
          %p302 = pneg %p76
        $region42: #{tpu_custom_call.1} parent=39 // pred_check_branch
          %304 = sbr.rel (%p302) target = $region44
        $region43: #{tpu_custom_call.1} parent=39 // pred_region
          %s305 = sand.u32 %s66, 1
          %s306 = scalar_lea.sflag [#allocation4], %s305
          %s307 = sand.u32 %s66, 1
          %s308 = smul.addr %s307, 16
          %s309 = scalar_lea.vmem [#allocation7], %s308
          %s310 = smul.u32 2, %s28
          %s312 = ssub.s32 256, 256
          %313 = vsyncadd %s306, %s312
          %s314 = smul.addr %s29, 2
          %s315 = sadd.s32 %s310, %s314
          %s316 = smul.addr %s315, 128
          %s317 = scalar_lea.hbm %s1, %s316
          %s318 = sshll.u32 %s309, 4
          %s319 = int_to_ptr.vmem [resolvable:$true] %s318
          %324 = dma.hbm_to_vmem [thread:$0]  %s317, 256, %s319, %s306, 128, 128, 8
        $region44: #{tpu_custom_call.1} parent=39 // pred_fallthru
          _
      $region40: #{tpu_custom_call.1} parent=5 // pred_fallthru
        _
      %p325 = scmp.le.s32.totalorder 1, %s21
      %p326 = scmp.lt.s32.totalorder %s21, 6
      %p327 = pnand %p325, %p326
      %p328 = pneg %p327
      // Predicated region
      $region45: #{tpu_custom_call.1} parent=5 // pred_check
        _
      $region46: #{tpu_custom_call.1} parent=5 // pred_check_branch
        %330 = sbr.rel (%p327) target = $region48
      $region47: #{tpu_custom_call.1} parent=5 // pred_region
        %s331 = ssub.s32 %s21, 1
        // Predicated region
        $region49: #{tpu_custom_call.1} parent=47 // pred_check
          %p332 = pneg %p54
        $region50: #{tpu_custom_call.1} parent=47 // pred_check_branch
          %334 = sbr.rel (%p332) target = $region52
        $region51: #{tpu_custom_call.1} parent=47 // pred_region
          %335 = dma.done [#allocation6], 16
        $region52: #{tpu_custom_call.1} parent=47 // pred_fallthru
          _
        %s336 = sand.u32 %s69, 1
        %s337 = scalar_lea.sflag [#allocation4], %s336
        %s338 = sand.u32 %s69, 1
        %s339 = smul.addr %s338, 16
        %s340 = scalar_lea.vmem [#allocation7], %s339
        // Predicated region
        $region53: #{tpu_custom_call.1} parent=47 // pred_check
          %p341 = pneg %p82
        $region54: #{tpu_custom_call.1} parent=47 // pred_check_branch
          %343 = sbr.rel (%p341) target = $region56
        $region55: #{tpu_custom_call.1} parent=47 // pred_region
          %344 = dma.done %s337, 256
        $region56: #{tpu_custom_call.1} parent=47 // pred_fallthru
          _
        // Predicated region
        $region57: #{tpu_custom_call.1} parent=47 // pred_check
          %p345 = pneg %p103
        $region58: #{tpu_custom_call.1} parent=47 // pred_check_branch
          %347 = sbr.rel (%p345) target = $region60
        $region59: #{tpu_custom_call.1} parent=47 // pred_region
          %348 = dma.done [#allocation9], 512
        $region60: #{tpu_custom_call.1} parent=47 // pred_fallthru
          _
        // Predicated region
        $region61: #{tpu_custom_call.1} parent=47 // pred_check
          %p349 = pneg %p166
        $region62: #{tpu_custom_call.1} parent=47 // pred_check_branch
          %351 = sbr.rel (%p349) target = $region64
        $region63: #{tpu_custom_call.1} parent=47 // pred_region
          %352 = dma.done [#allocation9], 1024
        $region64: #{tpu_custom_call.1} parent=47 // pred_fallthru
          _
        %353 = sfence
        %p354 = pneg %p54
        %p355 = pneg %p51
        %s356 = sand.u32 %s69, 1
        %s357 = scalar_lea.sflag [#allocation4], %s356
        %s358 = sand.u32 %s69, 1
        %s359 = smul.addr %s358, 16
        %s360 = scalar_lea.vmem [#allocation7], %s359
        %p361 = pneg %p82
        %p362 = pneg %p79
        %p363 = pneg %p103
        %p364 = pneg %p100
        %p365 = pneg %p124
        %p366 = pneg %p121
        %p367 = pneg %p145
        %p368 = pneg %p142
        %p369 = pneg %p166
        %p370 = pneg %p163
        %p371 = pneg %p187
        %p372 = pneg %p184
        %p373 = pneg %p213
        %p374 = pneg %p210
        %s375 = smul.u32 2, %s30
        %p376 = scmp.lt.s32.totalorder %s375, 1
        %s377 = scalar_select %p376, %s375, 1
        %s378 = smul.addr %s377, 8
        %s379 = scalar_lea.vmem %s7, %s378
        %p380 = pneg %p239
        %p381 = pneg %p236
        %s382 = smul.u32 2, %s30
        %s383 = smul.u32 2, %s30
        %p384 = scmp.lt.s32.totalorder %s383, 1
        %s385 = scalar_select %p384, %s383, 1
        %s386 = smul.addr %s385, 8
        %s387 = scalar_lea.vmem %s7, %s386
        %s388 = smul.u32 2, %s30
        %s389 = smul.u32 2, %s30
        %v391 = vld [vmem:[%s340] sm:$0xff]
        %v392 = vld [vmem:[%s340 + $0x8] sm:$0xff]
        %v393 = vpack.c.bf16 %v392, %v391
        %v394 = vld [vmem:[#allocation8] sm:$0xf]
        %v395 = vld [vmem:[#allocation8 + $0x4] sm:$0xf]
        %v396 = vld [vmem:[#allocation8 + $0x8] sm:$0xf]
        %v397 = vld [vmem:[#allocation8 + $0xc] sm:$0xf]
        %v398 = vld [vmem:[#allocation8 + $0x10] sm:$0xf]
        %v399 = vld [vmem:[#allocation8 + $0x14] sm:$0xf]
        %v400 = vld [vmem:[#allocation8 + $0x18] sm:$0xf]
        %v401 = vld [vmem:[#allocation8 + $0x1c] sm:$0xf]
        %v410 = vunpack.c.l.b16 %v394
        %v411 = vunpack.c.l.b16 %v395
        %v412 = vunpack.c.l.b16 %v396
        %v413 = vunpack.c.l.b16 %v397
        %v414 = vunpack.c.l.b16 %v398
        %v415 = vunpack.c.l.b16 %v399
        %v416 = vunpack.c.l.b16 %v400
        %v417 = vunpack.c.l.b16 %v401
        %v418 = vpack.c.b16 %v411, %v410
        %v419 = vpack.c.b16 %v413, %v412
        %v420 = vpack.c.b16 %v415, %v414
        %v421 = vpack.c.b16 %v417, %v416
        %vm426 = vcmask 523264
        %v428 = vsel %vm426, %v393, 0
        %430 = vmatprep.subr.bf16.mxu0 0
        %431 = vmatpush1.bf16.msra.mxu0 %v418
        %432 = vmatprep.subr.bf16.mxu0 0
        %433 = vmatpush1.bf16.msra.mxu0 %v419
        %434 = vmatprep.subr.bf16.mxu0 0
        %435 = vmatpush1.bf16.msra.mxu0 %v420
        %436 = vmatprep.subr.bf16.mxu0 0
        %437 = vmatpush1.bf16.msra.mxu0 %v421
        %438 = vmatprep.subr.bf16.mxu0 0
        %439 = vmatpush1.bf16.msra.mxu0 0
        %440 = vmatprep.subr.bf16.mxu0 0
        %441 = vmatpush1.bf16.msra.mxu0 0
        %442 = vmatprep.subr.bf16.mxu0 0
        %443 = vmatpush1.bf16.msra.mxu0 0
        %444 = vmatprep.subr.bf16.mxu0 0
        %445 = vmatpush1.bf16.msra.mxu0 0
        %446 = vmatprep.subr.bf16.mxu0 0
        %447 = vmatpush1.bf16.msra.mxu0 0
        %448 = vmatprep.subr.bf16.mxu0 0
        %449 = vmatpush1.bf16.msra.mxu0 0
        %450 = vmatprep.subr.bf16.mxu0 0
        %451 = vmatpush1.bf16.msra.mxu0 0
        %452 = vmatprep.subr.bf16.mxu0 0
        %453 = vmatpush1.bf16.msra.mxu0 0
        %454 = vmatprep.subr.bf16.mxu0 0
        %455 = vmatpush1.bf16.msra.mxu0 0
        %456 = vmatprep.subr.bf16.mxu0 0
        %457 = vmatpush1.bf16.msra.mxu0 0
        %458 = vmatprep.subr.bf16.mxu0 0
        %459 = vmatpush1.bf16.msra.mxu0 0
        %460 = vmatprep.subr.bf16.mxu0 0
        %461 = vmatpush1.bf16.msra.mxu0 0
        %462 = vmatprep.mubr.bf16.mxu0 0
        %463 = vmatmul.mubr.bf16.gmra.mrb[0].mxu0 %v428
        %v464 = vpop.f32.mrb[0].mxu0
        %v465 = vadd.f32 0.0, %v464
        %v466 = vpop.f32.mrb[0].mxu0
        %v467 = vpop.f32.mrb[0].mxu0
        %v468 = vadd.f32 0.0, %v467
        %v469 = vpop.f32.mrb[0].mxu0
        %470 = vdwg.mxu0
        %p471 = scmp.eq.s32.totalorder %s31, 0
        // Predicated region
        $region65: #{tpu_custom_call.1} parent=47 // pred_check
          %p472 = pneg %p471
        $region66: #{tpu_custom_call.1} parent=47 // pred_check_branch
          %474 = sbr.rel (%p472) target = $region68
        $region67: #{tpu_custom_call.1} parent=47 // pred_region
          %s475 = sld [smem:[#allocation3]]
          %v476 = vstv %s475
          %v477 = vmul.f32 %v476, %v465
          %v478 = vmul.f32 %v476, %v468
          %479 = vst [vmem:[#allocation2] sm:$0xff] %v477
          %480 = vst [vmem:[#allocation2 + $0x8] sm:$0xff] %v478
        $region68: #{tpu_custom_call.1} parent=47 // pred_fallthru
          _
        %p481 = scmp.gt.s32.totalorder %s31, 0
        // Predicated region
        $region69: #{tpu_custom_call.1} parent=47 // pred_check
          %p482 = pneg %p481
        $region70: #{tpu_custom_call.1} parent=47 // pred_check_branch
          %484 = sbr.rel (%p482) target = $region72
        $region71: #{tpu_custom_call.1} parent=47 // pred_region
          %v485 = vld [vmem:[#allocation2] sm:$0xff]
          %v486 = vld [vmem:[#allocation2 + $0x8] sm:$0xff]
          %s487 = sld [smem:[#allocation3 + %s31]]
          %v488 = vstv %s487
          %v489 = vmul.f32 %v488, %v465
          %v490 = vmul.f32 %v488, %v468
          %v491 = vadd.f32 %v485, %v489
          %v492 = vadd.f32 %v486, %v490
          %493 = vst [vmem:[#allocation2] sm:$0xff] %v491
          %494 = vst [vmem:[#allocation2 + $0x8] sm:$0xff] %v492
        $region72: #{tpu_custom_call.1} parent=47 // pred_fallthru
          _
        %p495 = scmp.eq.s32.totalorder %s31, 4
        // Predicated region
        $region73: #{tpu_custom_call.1} parent=47 // pred_check
          %p496 = pneg %p495
        $region74: #{tpu_custom_call.1} parent=47 // pred_check_branch
          %498 = sbr.rel (%p496) target = $region76
        $region75: #{tpu_custom_call.1} parent=47 // pred_region
          %v499 = vld [vmem:[#allocation2] sm:$0xff]
          %v500 = vld [vmem:[#allocation2 + $0x8] sm:$0xff]
          %v501 = vld [vmem:[%s3] sm:$0x1]
          %v503 = vlaneseq
          %v504 = vshrl.u32 %v503, 7
          %v505 = vsub.s32 0, %v504
          %v506 = vrot.slane %v501, %v505
          %v508 = vadd.f32 %v499, %v506
          %v509 = vadd.f32 %v500, %v506
          %v510 = vld [vmem:[%s4] sm:$0x1]
          %v512 = vlaneseq
          %v513 = vshrl.u32 %v512, 7
          %v514 = vsub.s32 0, %v513
          %v515 = vrot.slane %v510, %v514
          %v517 = vadd.f32 %v508, %v515
          %v518 = vadd.f32 %v509, %v515
          %v519 = vpack.c.bf16 %v518, %v517
          %v520 = vld [vmem:[#allocation10] sm:$0xf]
          %v521 = vld [vmem:[#allocation10 + $0x4] sm:$0xf]
          %v522 = vld [vmem:[#allocation10 + $0x8] sm:$0xf]
          %v523 = vld [vmem:[#allocation10 + $0xc] sm:$0xf]
          %v524 = vld [vmem:[#allocation10 + $0x10] sm:$0xf]
          %v525 = vld [vmem:[#allocation10 + $0x14] sm:$0xf]
          %v526 = vld [vmem:[#allocation10 + $0x18] sm:$0xf]
          %v527 = vld [vmem:[#allocation10 + $0x1c] sm:$0xf]
          %v528 = vld [vmem:[#allocation10 + $0x20] sm:$0xf]
          %v529 = vld [vmem:[#allocation10 + $0x24] sm:$0xf]
          %v530 = vld [vmem:[#allocation10 + $0x28] sm:$0xf]
          %v531 = vld [vmem:[#allocation10 + $0x2c] sm:$0xf]
          %v532 = vld [vmem:[#allocation10 + $0x30] sm:$0xf]
          %v533 = vld [vmem:[#allocation10 + $0x34] sm:$0xf]
          %v534 = vld [vmem:[#allocation10 + $0x38] sm:$0xf]
          %v535 = vld [vmem:[#allocation10 + $0x3c] sm:$0xf]
          %v552 = vunpack.c.l.b16 %v520
          %v553 = vunpack.c.l.b16 %v521
          %v554 = vunpack.c.l.b16 %v522
          %v555 = vunpack.c.l.b16 %v523
          %v556 = vunpack.c.l.b16 %v524
          %v557 = vunpack.c.l.b16 %v525
          %v558 = vunpack.c.l.b16 %v526
          %v559 = vunpack.c.l.b16 %v527
          %v560 = vunpack.c.l.b16 %v528
          %v561 = vunpack.c.l.b16 %v529
          %v562 = vunpack.c.l.b16 %v530
          %v563 = vunpack.c.l.b16 %v531
          %v564 = vunpack.c.l.b16 %v532
          %v565 = vunpack.c.l.b16 %v533
          %v566 = vunpack.c.l.b16 %v534
          %v567 = vunpack.c.l.b16 %v535
          %v568 = vpack.c.b16 %v553, %v552
          %v569 = vpack.c.b16 %v555, %v554
          %v570 = vpack.c.b16 %v557, %v556
          %v571 = vpack.c.b16 %v559, %v558
          %v572 = vpack.c.b16 %v561, %v560
          %v573 = vpack.c.b16 %v563, %v562
          %v574 = vpack.c.b16 %v565, %v564
          %v575 = vpack.c.b16 %v567, %v566
          %584 = vmatprep.subr.bf16.mxu0 0
          %585 = vmatpush1.bf16.msra.mxu0 %v568
          %586 = vmatprep.subr.bf16.mxu0 0
          %587 = vmatpush1.bf16.msra.mxu0 %v569
          %588 = vmatprep.subr.bf16.mxu0 0
          %589 = vmatpush1.bf16.msra.mxu0 %v570
          %590 = vmatprep.subr.bf16.mxu0 0
          %591 = vmatpush1.bf16.msra.mxu0 %v571
          %592 = vmatprep.subr.bf16.mxu0 0
          %593 = vmatpush1.bf16.msra.mxu0 %v572
          %594 = vmatprep.subr.bf16.mxu0 0
          %595 = vmatpush1.bf16.msra.mxu0 %v573
          %596 = vmatprep.subr.bf16.mxu0 0
          %597 = vmatpush1.bf16.msra.mxu0 %v574
          %598 = vmatprep.subr.bf16.mxu0 0
          %599 = vmatpush1.bf16.msra.mxu0 %v575
          %600 = vmatprep.subr.bf16.mxu0 0
          %601 = vmatpush1.bf16.msra.mxu0 0
          %602 = vmatprep.subr.bf16.mxu0 0
          %603 = vmatpush1.bf16.msra.mxu0 0
          %604 = vmatprep.subr.bf16.mxu0 0
          %605 = vmatpush1.bf16.msra.mxu0 0
          %606 = vmatprep.subr.bf16.mxu0 0
          %607 = vmatpush1.bf16.msra.mxu0 0
          %608 = vmatprep.subr.bf16.mxu0 0
          %609 = vmatpush1.bf16.msra.mxu0 0
          %610 = vmatprep.subr.bf16.mxu0 0
          %611 = vmatpush1.bf16.msra.mxu0 0
          %612 = vmatprep.subr.bf16.mxu0 0
          %613 = vmatpush1.bf16.msra.mxu0 0
          %614 = vmatprep.subr.bf16.mxu0 0
          %615 = vmatpush1.bf16.msra.mxu0 0
          %616 = vmatprep.mubr.bf16.mxu0 0
          %617 = vmatmul.mubr.bf16.gmra.mrb[0].mxu0 %v519
          %v618 = vpop.f32.mrb[0].mxu0
          %v619 = vadd.f32 0.0, %v618
          %v620 = vpop.f32.mrb[0].mxu0
          %v621 = vpop.f32.mrb[0].mxu0
          %v622 = vadd.f32 0.0, %v621
          %v623 = vpop.f32.mrb[0].mxu0
          %624 = vdwg.mxu0
          %v625 = vld [vmem:[%s6] sm:$0x1]
          %v626 = vmul.f32 %v619, 2.0
          %v627 = vmul.f32 %v622, 2.0
          %v629 = vlaneseq
          %v630 = vshrl.u32 %v629, 7
          %v631 = vsub.s32 0, %v630
          %v632 = vrot.slane %v625, %v631
          %v634 = vsub.f32 %v632, %v626
          %v635 = vsub.f32 %v632, %v627
          %v636 = vlaneseq
          %v637 = vand.u32 %v636, 127
          %638 = vmin.xlane.f32.xlu0 %v634
          %v639 = vpop.xlane.xlu0 %638
          %640 = vmin.xlane.f32.xlu0 %v635
          %v641 = vpop.xlane.xlu0 %640
          %vm642 = vcmp.eq.f32.partialorder %v634, %v639
          %vm643 = vcmp.eq.f32.partialorder %v635, %v641
          %v644 = vsel %vm642, %v637, 128
          %v645 = vsel %vm643, %v637, 128
          %v646 = vand.u32 %v644, 65535
          %v647 = vshra.s32 %v644, 16
          %v648 = vcvt.s32.f32 %v646
          %v649 = vcvt.s32.f32 %v647
          %650 = vmin.xlane.f32.xlu0 %v649
          %v651 = vpop.xlane.xlu0 %650
          %vm652 = vcmp.eq.f32.partialorder %v649, %v651
          %v653 = vsel %vm652, %v648, inf
          %654 = vmin.xlane.f32.xlu0 %v653
          %v655 = vpop.xlane.xlu0 %654
          %v656 = vcvt.f32.s32 %v655
          %v657 = vcvt.f32.s32 %v651
          %v658 = vshll.u32 %v657, 16
          %v659 = vadd.s32 %v658, %v656
          %v660 = vand.u32 %v645, 65535
          %v661 = vshra.s32 %v645, 16
          %v662 = vcvt.s32.f32 %v660
          %v663 = vcvt.s32.f32 %v661
          %664 = vmin.xlane.f32.xlu0 %v663
          %v665 = vpop.xlane.xlu0 %664
          %vm666 = vcmp.eq.f32.partialorder %v663, %v665
          %v667 = vsel %vm666, %v662, inf
          %668 = vmin.xlane.f32.xlu0 %v667
          %v669 = vpop.xlane.xlu0 %668
          %v670 = vcvt.f32.s32 %v669
          %v671 = vcvt.f32.s32 %v665
          %v672 = vshll.u32 %v671, 16
          %v673 = vadd.s32 %v672, %v670
          %vm674 = vcmask 7168
          %675 = vst.msk [vmem:[%s387] sm:$0xff] %vm674, %v659
          %676 = vst.msk [vmem:[%s387 + $0x8] sm:$0xff] %vm674, %v673
          %677 = vst [vmem:[#allocation11] sm:$0xff] %v508
          %678 = vst [vmem:[#allocation11 + $0x8] sm:$0xff] %v509
        $region76: #{tpu_custom_call.1} parent=47 // pred_fallthru
          _
        %s679 = smul.u32 2, %s30
        %p680 = scmp.lt.s32.totalorder %s679, 1
        %s681 = scalar_select %p680, %s679, 1
        %s682 = smul.addr %s681, 8
        %s683 = scalar_lea.vmem %s7, %s682
        // Predicated region
        $region77: #{tpu_custom_call.1} parent=47 // pred_check
          %p684 = pneg %p210
        $region78: #{tpu_custom_call.1} parent=47 // pred_check_branch
          %686 = sbr.rel (%p684) target = $region80
        $region79: #{tpu_custom_call.1} parent=47 // pred_region
          %s687 = smul.u32 2, %s30
        $region80: #{tpu_custom_call.1} parent=47 // pred_fallthru
          _
        // Predicated region
        $region81: #{tpu_custom_call.1} parent=47 // pred_check
          %p688 = pneg %p236
        $region82: #{tpu_custom_call.1} parent=47 // pred_check_branch
          %690 = sbr.rel (%p688) target = $region84
        $region83: #{tpu_custom_call.1} parent=47 // pred_region
          %s691 = smul.u32 2, %s30
          %s693 = ssub.s32 256, 256
          %694 = vsyncadd [#allocation5], %s693
          %s695 = smul.addr %s691, 128
          %s696 = scalar_lea.hbm %s8, %s695
          %s697 = sshll.u32 [#allocation11], 4
          %s698 = int_to_ptr.vmem [resolvable:$true] %s697
          %703 = dma.vmem_to_hbm [thread:$0]  %s698, 256, %s696, [#allocation5], 128, 128, 8
        $region84: #{tpu_custom_call.1} parent=47 // pred_fallthru
          _
        // Predicated region
        $region85: #{tpu_custom_call.1} parent=47 // pred_check
          %p704 = pneg %p210
        $region86: #{tpu_custom_call.1} parent=47 // pred_check_branch
          %706 = sbr.rel (%p704) target = $region88
        $region87: #{tpu_custom_call.1} parent=47 // pred_region
          %s707 = smul.u32 2, %s30
          %p708 = scmp.lt.s32.totalorder %s707, 1
          %s709 = scalar_select %p708, %s707, 1
          %s710 = smul.addr %s709, 8
          %s711 = scalar_lea.vmem %s7, %s710
        $region88: #{tpu_custom_call.1} parent=47 // pred_fallthru
          _
        // Predicated region
        $region89: #{tpu_custom_call.1} parent=47 // pred_check
          %p712 = pneg %p236
        $region90: #{tpu_custom_call.1} parent=47 // pred_check_branch
          %714 = sbr.rel (%p712) target = $region92
        $region91: #{tpu_custom_call.1} parent=47 // pred_region
          %715 = dma.done [#allocation5], 256
        $region92: #{tpu_custom_call.1} parent=47 // pred_fallthru
          _
      $region48: #{tpu_custom_call.1} parent=5 // pred_fallthru
        _
      %p716 = scmp.le.s32.totalorder 2, %s21
      // Predicated region
      $region93: #{tpu_custom_call.1} parent=5 // pred_check
        %p717 = pneg %p716
      $region94: #{tpu_custom_call.1} parent=5 // pred_check_branch
        %719 = sbr.rel (%p717) target = $region96
      $region95: #{tpu_custom_call.1} parent=5 // pred_region
        %s720 = ssub.s32 %s21, 2
      $region96: #{tpu_custom_call.1} parent=5 // pred_fallthru
        _
    $region6: #{tpu_custom_call.1} parent=1 // loop_footer
      %s25 = sadd.s32 1, %s21
    $region7: #{tpu_custom_call.1} parent=1 // loop_footer_branch
      %20 = sbr.rel target = $region3
    $region8: #{tpu_custom_call.1} parent=1 // loop_exit
      _
    %721 = vsyncpa [#allocation4], 1
    %s722 = scalar_lea.sflag [#allocation4], 1
    %723 = vsyncpa %s722, 1
    %724 = vsyncpa [#allocation9], 1
    %725 = vsyncpa [#allocation5], 1
    %s726 = scalar_lea.sflag [#allocation5], 1
    %727 = vsyncpa %s726, 1
    %728 = vsyncpa [#allocation6], 1
    %s729 = scalar_lea.sflag [#allocation6], 1
    %730 = vsyncpa %s729, 1

</llo_original>
